<compile_context>
chip_gen: v7x
topology: tpu7x:2x2x1
jax: 0.10.0
libtpu: 0.0.40
codegen_flags: <defaults>
</compile_context>

<pallas_src>
import functools

import jax
import jax.numpy as jnp
from jax.experimental import pallas as pl
from jax.experimental.pallas import tpu as pltpu


# ----------------------------- helpers ------------------------------------

def _vmem_limit_bytes():
    """Scoped-VMEM limit sized per TPU generation instead of a fixed 32 MiB."""
    phys = 128 * 1024 * 1024
    try:
        phys = int(pltpu.get_tpu_info().vmem_capacity_bytes)
    except Exception:  # older jax / interpret mode: keep conservative default
        pass
    # Leave headroom: ~3/4 of physical, capped at 100 MiB (v5e/v6e), which on
    # v7x (64 MiB physical) lands at ~48 MiB.
    return int(min(max(phys * 3 // 4, 32 * 1024 * 1024), 100 * 1024 * 1024))


# ----------------------------- Pallas kernel ------------------------------

def _ws_conv_kernel(x_ref, w_ref, b_ref, o_ref, *, taps, m_rows):
    """Full stride-1 conv for one image as a single fat-K matmul.

    x_ref : (Cin_pad, Lpad)        bf16  flattened zero-padded image
                                         (channel on sublanes, spatial on lanes)
    w_ref : (Cout, KH*KW*Cin_pad)  bf16  WS scale already folded in
    b_ref : (Cout, 1)              f32
    o_ref : (Cout, m_rows)         f32   m_rows = Ho*Wp (wrap cols sliced later)
    """
    x = x_ref[...]
    # im2col operand assembled on-chip: contraction dim (taps x channels) on
    # sublanes, flattened output position on lanes (lane-dense, >= 128 wide).
    patches = jnp.concatenate([x[:, r:r + m_rows] for r in taps], axis=0)
    acc = jnp.dot(w_ref[...], patches, preferred_element_type=jnp.float32)
    o_ref[...] = acc + b_ref[...]


# ------------------------------- wrapper ----------------------------------

def ws_conv2d(x_nchw, weight, bias, *, stride=1, padding=1, gain=2.0):
    """WSConv2d forward.  x: (N, Cin, H, W) f32, weight: (Cout, Cin, KH, KW),
    bias: (Cout,).  Returns (N, Cout, Ho, Wo) f32 (PyTorch NCHW layout)."""
    N, Cin, H, W = x_nchw.shape
    Cout, _, KH, KW = weight.shape
    scale = (gain / (Cin * KH * KW)) ** 0.5

    Hp, Wp = H + 2 * padding, W + 2 * padding
    Ho1, Wo1 = Hp - KH + 1, Wp - KW + 1               # stride-1 output extent
    # Round Cin up to the bf16 sublane packing so the in-kernel tap concat is
    # aligned (padded channels are zero in both x and weight -> no effect).
    Cin_pad = -(-Cin // 16) * 16
    # Extra zero rows at the bottom so the last tap's shifted slice of the
    # flattened image stays in bounds.
    extra_rows = -(-(KW - 1) // Wp)
    rows_total = Hp + extra_rows
    Lpad = rows_total * Wp
    m_rows = Ho1 * Wp
    K = KH * KW * Cin_pad
    taps = tuple(kh * Wp + kw for kh in range(KH) for kw in range(KW))

    # Single pad pass: channel round-up + spatial zero-pad + overhang rows.
    xf = jnp.pad(x_nchw, ((0, 0), (0, Cin_pad - Cin),
                          (padding, padding + extra_rows),
                          (padding, padding)))
    xf = xf.reshape(N, Cin_pad, Lpad).astype(jnp.bfloat16)

    # Fold the WS scale into the weight once; (co, kh, kw, ci) column ordering
    # matches the kernel's tap concat.
    w2d = jnp.pad(weight, ((0, 0), (0, Cin_pad - Cin), (0, 0), (0, 0)))
    w2d = (jnp.transpose(w2d, (0, 2, 3, 1)).reshape(Cout, K)
           * scale).astype(jnp.bfloat16)
    b2d = bias.reshape(Cout, 1).astype(jnp.float32)

    out_flat = pl.pallas_call(
        functools.partial(_ws_conv_kernel, taps=taps, m_rows=m_rows),
        out_shape=jax.ShapeDtypeStruct((N, Cout, m_rows), jnp.float32),
        grid=(N,),
        in_specs=[
            pl.BlockSpec((pl.Squeezed(), Cin_pad, Lpad), lambda n: (n, 0, 0)),
            pl.BlockSpec((Cout, K), lambda n: (0, 0)),    # VMEM-resident weight
            pl.BlockSpec((Cout, 1), lambda n: (0, 0)),
        ],
        out_specs=pl.BlockSpec((pl.Squeezed(), Cout, m_rows),
                               lambda n: (n, 0, 0)),
        compiler_params=pltpu.CompilerParams(
            dimension_semantics=("parallel",),
            vmem_limit_bytes=_vmem_limit_bytes()),
    )(xf, w2d, b2d)

    # Drop the (Wp - Wo1) wrap columns; the result is already NCHW.
    y = out_flat.reshape(N, Cout, Ho1, Wp)[:, :, :, :Wo1]
    if stride != 1:
        # TODO(synk): ProGAN only uses stride=1; for stride>1 this computes
        # the full stride-1 output and subsamples (stride^2 redundant work).
        y = y[:, :, ::stride, ::stride]
    return y


# --------------------------- pure-JAX reference ---------------------------

def ws_conv2d_reference(x, weight, bias, *, stride=1, padding=1, gain=2.0):
    Cout, Cin, KH, KW = weight.shape
    scale = (gain / (Cin * KH * KW)) ** 0.5
    y = jax.lax.conv_general_dilated(
        x * scale, weight, window_strides=(stride, stride),
        padding=[(padding, padding), (padding, padding)],
        dimension_numbers=("NCHW", "OIHW", "NCHW"))
    return y + bias.reshape(1, Cout, 1, 1)


# ---------------------------------- main ----------------------------------

if __name__ == "__main__":
    key = jax.random.PRNGKey(0)
    kx, kw = jax.random.split(key)

    N, Cin, H, W = 2, 4, 16, 16
    Cout, Ksz = 32, 3
    x = jax.random.normal(kx, (N, Cin, H, W), dtype=jnp.float32)             # NCHW
    weight = jax.random.normal(kw, (Cout, Cin, Ksz, Ksz), dtype=jnp.float32)  # nn.init.normal_
    bias = jnp.zeros((Cout,), dtype=jnp.float32)                              # nn.init.zeros_

    # main 3x3 / pad-1 WSConv2d
    out = jax.block_until_ready(
        ws_conv2d(x, weight, bias, stride=1, padding=1, gain=2.0))
    assert out.shape == (N, Cout, H, W), out.shape
    ref = ws_conv2d_reference(x, weight, bias, stride=1, padding=1, gain=2.0)
    err = float(jnp.max(jnp.abs(out - ref)))
    assert err < 5e-2, f"3x3 conv mismatch: {err}"     # bf16 operands, f32 accum

    # 1x1 / pad-0 variant (ProGAN rgb layers) through the same kernel
    w1 = jax.random.normal(jax.random.PRNGKey(1), (Cout, Cin, 1, 1),
                           dtype=jnp.float32)
    out1 = jax.block_until_ready(
        ws_conv2d(x, w1, bias, stride=1, padding=0, gain=2.0))
    ref1 = ws_conv2d_reference(x, w1, bias, stride=1, padding=0, gain=2.0)
    assert out1.shape == (N, Cout, H, W), out1.shape
    err1 = float(jnp.max(jnp.abs(out1 - ref1)))
    assert err1 < 5e-2, f"1x1 conv mismatch: {err1}"

    assert bool(jnp.all(jnp.isfinite(out)))
    print("KERNEL_OK")
</pallas_src>

<mosaic_0001>
module attributes {stable_mosaic.version = 11 : i64} {
  func.func @_ws_conv_kernel(%arg0: i32, %arg1: memref<1x16x342xbf16, #tpu.memory_space<vmem>>, %arg2: memref<32x144xbf16, #tpu.memory_space<vmem>>, %arg3: memref<32x1xf32, #tpu.memory_space<vmem>>, %arg4: memref<1x32x288xf32, #tpu.memory_space<vmem>>) attributes {dimension_semantics = [#tpu.dimension_semantics<parallel>], iteration_bounds = array<i64: 2>, scalar_prefetch = 0 : i64, scratch_operands = 0 : i64, tpu.core_type = #tpu.core_type<tc>, window_params = [{transform_indices = @transform_0, window_bounds = array<i64: 1, 16, 342>}, {pipeline_mode = #tpu.pipeline_mode<synchronous>, transform_indices = @transform_1, window_bounds = array<i64: 32, 144>}, {pipeline_mode = #tpu.pipeline_mode<synchronous>, transform_indices = @transform_2, window_bounds = array<i64: 32, 1>}, {transform_indices = @transform_3, window_bounds = array<i64: 1, 32, 288>}]} {
    %c0 = arith.constant 0 : index
    %c0_0 = arith.constant 0 : index
    %c0_1 = arith.constant 0 : index
    %0 = vector.load %arg1[%c0, %c0_0, %c0_1] : memref<1x16x342xbf16, #tpu.memory_space<vmem>>, vector<1x16x342xbf16>
    %1 = vector.shape_cast %0 : vector<1x16x342xbf16> to vector<16x342xbf16>
    %2 = vector.extract_strided_slice %1 {offsets = [0, 0], sizes = [16, 288], strides = [1, 1]} : vector<16x342xbf16> to vector<16x288xbf16>
    %3 = vector.extract_strided_slice %1 {offsets = [0, 1], sizes = [16, 288], strides = [1, 1]} : vector<16x342xbf16> to vector<16x288xbf16>
    %4 = vector.extract_strided_slice %1 {offsets = [0, 2], sizes = [16, 288], strides = [1, 1]} : vector<16x342xbf16> to vector<16x288xbf16>
    %5 = vector.extract_strided_slice %1 {offsets = [0, 18], sizes = [16, 288], strides = [1, 1]} : vector<16x342xbf16> to vector<16x288xbf16>
    %6 = vector.extract_strided_slice %1 {offsets = [0, 19], sizes = [16, 288], strides = [1, 1]} : vector<16x342xbf16> to vector<16x288xbf16>
    %7 = vector.extract_strided_slice %1 {offsets = [0, 20], sizes = [16, 288], strides = [1, 1]} : vector<16x342xbf16> to vector<16x288xbf16>
    %8 = vector.extract_strided_slice %1 {offsets = [0, 36], sizes = [16, 288], strides = [1, 1]} : vector<16x342xbf16> to vector<16x288xbf16>
    %9 = vector.extract_strided_slice %1 {offsets = [0, 37], sizes = [16, 288], strides = [1, 1]} : vector<16x342xbf16> to vector<16x288xbf16>
    %10 = vector.extract_strided_slice %1 {offsets = [0, 38], sizes = [16, 288], strides = [1, 1]} : vector<16x342xbf16> to vector<16x288xbf16>
    %11 = tpu.concatenate %2, %3, %4, %5, %6, %7, %8, %9, %10 in 0 : vector<16x288xbf16>, vector<16x288xbf16>, vector<16x288xbf16>, vector<16x288xbf16>, vector<16x288xbf16>, vector<16x288xbf16>, vector<16x288xbf16>, vector<16x288xbf16>, vector<16x288xbf16> -> vector<144x288xbf16>
    %c0_2 = arith.constant 0 : index
    %c0_3 = arith.constant 0 : index
    %12 = vector.load %arg2[%c0_2, %c0_3] : memref<32x144xbf16, #tpu.memory_space<vmem>>, vector<32x144xbf16>
    %cst = arith.constant dense<0.000000e+00> : vector<32x288xf32>
    %13 = tpu.matmul %12, %11, %cst {dimension_numbers = #tpu.dot_dimension_numbers<[1], [0], [0], [1], [0, 0, 1, 1], [], []>} : vector<32x144xbf16>, vector<144x288xbf16>, vector<32x288xf32> -> vector<32x288xf32>
    %c0_4 = arith.constant 0 : index
    %c0_5 = arith.constant 0 : index
    %14 = vector.load %arg3[%c0_4, %c0_5] : memref<32x1xf32, #tpu.memory_space<vmem>>, vector<32x1xf32>
    %15 = vector.broadcast %14 : vector<32x1xf32> to vector<32x288xf32>
    %16 = arith.addf %13, %15 : vector<32x288xf32>
    %c0_6 = arith.constant 0 : index
    %c0_7 = arith.constant 0 : index
    %c0_8 = arith.constant 0 : index
    %17 = vector.load %arg4[%c0_6, %c0_7, %c0_8] : memref<1x32x288xf32, #tpu.memory_space<vmem>>, vector<1x32x288xf32>
    %18 = vector.shape_cast %17 : vector<1x32x288xf32> to vector<32x288xf32>
    %19 = vector.shape_cast %16 : vector<32x288xf32> to vector<1x32x288xf32>
    tpu.vector_store %arg4[%c0_6, %c0_7, %c0_8], %19 {strides = array<i32>} : memref<1x32x288xf32, #tpu.memory_space<vmem>>, vector<1x32x288xf32>,
    return
  }
  func.func @transform_0(%arg0: i32) -> (i32, i32, i32) {
    %c0_i32 = arith.constant 0 : i32
    %c0_i32_0 = arith.constant 0 : i32
    %c0_i32_1 = arith.constant 0 : i32
    return %arg0, %c0_i32, %c0_i32_0 : i32, i32, i32
  }
  func.func @transform_1(%arg0: i32) -> (i32, i32) {
    %c0_i32 = arith.constant 0 : i32
    %c0_i32_0 = arith.constant 0 : i32
    %c0_i32_1 = arith.constant 0 : i32
    return %c0_i32, %c0_i32_0 : i32, i32
  }
  func.func @transform_2(%arg0: i32) -> (i32, i32) {
    %c0_i32 = arith.constant 0 : i32
    %c0_i32_0 = arith.constant 0 : i32
    %c0_i32_1 = arith.constant 0 : i32
    return %c0_i32, %c0_i32_0 : i32, i32
  }
  func.func @transform_3(%arg0: i32) -> (i32, i32, i32) {
    %c0_i32 = arith.constant 0 : i32
    %c0_i32_0 = arith.constant 0 : i32
    %c0_i32_1 = arith.constant 0 : i32
    return %arg0, %c0_i32, %c0_i32_0 : i32, i32, i32
  }
}

</mosaic_0001>

<llo_original>
// kernel: tpu_custom_call.1
$region0: #{tpu_custom_call.1}
  #allocation0 [shape = 'u32[]', space=smem, size = 0x4, offset = 0x4, fixed_abs, tag = 'smem constant byte address 0x4 - core index']
  #allocation1 [shape = 'u32[144,128]{1,0:T(1,128)}', space=vmem, size = 0x12000, scoped, tag = 'internal scratch']
  %s0 = inlined_call_operand.hbm [shape: bf16[2,16,342], index: 0, kind: input, shape index: {}]
  %s1 = inlined_call_operand.hbm [shape: bf16[32,144], index: 1, kind: input, shape index: {}]
  %s2 = inlined_call_operand.hbm [shape: f32[32,1], index: 2, kind: input, shape index: {}]
  %s3 = inlined_call_operand.hbm [shape: f32[2,32,288], index: 3, kind: output, shape index: {}]
  %s4 = sld [smem:[#allocation0]]
  $region57: #{tpu_custom_call.1} parent=0
    _
  %s6 = ssub.s32 1, %s4
  %s7 = scalar_select 0, %s6, %s4
  $region1: #{tpu_custom_call.1} parent=0
    #allocation2 [shape = 'u8[24576]{0}', space=vmem, size = 0x6000, scoped, tag = 'input window, operand 0']
    #allocation3 [shape = 's32[2]{0}', space=sflag, size = 0x8, scoped, tag = 'scoped memory for tpu_custom_call.1']
    #allocation4 [shape = 's32[2]{0}', space=sflag, size = 0x8, scoped, tag = 'scoped memory for tpu_custom_call.1']
    #allocation5 [shape = 'u8[16384]{0}', space=vmem, size = 0x4000, scoped, tag = 'input window, operand 1, single buffered']
    #allocation6 [shape = 's32[1]{0}', space=sflag, size = 0x4, scoped, tag = 'scoped memory for tpu_custom_call.1']
    #allocation7 [shape = 'u8[16384]{0}', space=vmem, size = 0x4000, scoped, tag = 'input window, operand 2, single buffered']
    #allocation8 [shape = 'u8[98304]{0}', space=vmem, size = 0x18000, scoped, tag = 'output window, operand 0']
    %8 = vsyncpa [#allocation3], 0
    %s9 = scalar_lea.sflag [#allocation3], 1
    %10 = vsyncpa %s9, 0
    %11 = vsyncpa [#allocation6], 0
    %12 = vsyncpa [#allocation4], 0
    %s13 = scalar_lea.sflag [#allocation4], 1
    %14 = vsyncpa %s13, 0
    loop: start=0, step=1, limit=4
    $region2: #{tpu_custom_call.1} parent=1 // loop_pre_header
      _
    $region3: #{tpu_custom_call.1} parent=1 // loop_header
      %s16 = sphi 0, %s20
      %p17 = scmp.ge.s32.totalorder %s16, 4
      %s26 = sphi 0, %s28
      %s29 = sphi 0, %s26
      %s30 = sphi 0, %s29
      %s46 = sphi 0, %s30
      %s50 = sphi 0, %s50
      %s52 = sphi 0, %s50
      %s53 = sphi 0, %s52
      %s67 = sphi 0, %s53
      %s71 = sphi 0, %s71
      %s73 = sphi 0, %s71
      %s74 = sphi 0, %s73
      %s88 = sphi 0, %s74
      %s94 = sphi 0, %s96
      %s97 = sphi 0, %s94
      %s98 = sphi 0, %s97
      %s114 = sphi 0, %s98
    $region4: #{tpu_custom_call.1} parent=1 // loop_header_branch
      %19 = sbr.rel (%p17) target = $region8
    $region5: #{tpu_custom_call.1} parent=1 // loop_body
      %s21 = ssub.s32 %s16, 1
      %s22 = ssub.s32 %s16, 2
      %s23 = sadd.s32 %s16, 1
      %s24 = ssub.s32 %s16, %s23
      %p25 = scmp.eq.s32.totalorder %s24, 0
      %s27 = sadd.s32 %s26, 1
      %s28 = scalar_select %p25, %s26, %s27
      %p31 = pneg %p25
      %p32 = scmp.eq.s32.totalorder %s16, 1
      %p33 = por %p31, %p32
      %p34 = scmp.ne.s32.totalorder %s26, %s29
      %p35 = scmp.eq.s32.totalorder %s16, 0
      %p36 = por %p34, %p35
      %p37 = scmp.ne.s32.totalorder %s26, %s29
      %p38 = scmp.eq.s32.totalorder %s21, 1
      %p39 = por %p37, %p38
      %p40 = scmp.ne.s32.totalorder %s29, %s30
      %p41 = scmp.eq.s32.totalorder %s21, 0
      %p42 = por %p40, %p41
      %p43 = scmp.ne.s32.totalorder %s29, %s30
      %p44 = scmp.eq.s32.totalorder %s22, 1
      %p45 = por %p43, %p44
      %p47 = scmp.ne.s32.totalorder %s30, %s46
      %p48 = scmp.eq.s32.totalorder %s22, 0
      %p49 = por %p47, %p48
      %s51 = sadd.s32 %s50, 1
      %p54 = scmp.eq.s32.totalorder %s16, 1
      %p55 = scmp.ne.s32.totalorder %s50, %s52
      %p56 = scmp.eq.s32.totalorder %s16, 0
      %p57 = por %p55, %p56
      %p58 = scmp.ne.s32.totalorder %s50, %s52
      %p59 = scmp.eq.s32.totalorder %s21, 1
      %p60 = por %p58, %p59
      %p61 = scmp.ne.s32.totalorder %s52, %s53
      %p62 = scmp.eq.s32.totalorder %s21, 0
      %p63 = por %p61, %p62
      %p64 = scmp.ne.s32.totalorder %s52, %s53
      %p65 = scmp.eq.s32.totalorder %s22, 1
      %p66 = por %p64, %p65
      %p68 = scmp.ne.s32.totalorder %s53, %s67
      %p69 = scmp.eq.s32.totalorder %s22, 0
      %p70 = por %p68, %p69
      %s72 = sadd.s32 %s71, 1
      %p75 = scmp.eq.s32.totalorder %s16, 1
      %p76 = scmp.ne.s32.totalorder %s71, %s73
      %p77 = scmp.eq.s32.totalorder %s16, 0
      %p78 = por %p76, %p77
      %p79 = scmp.ne.s32.totalorder %s71, %s73
      %p80 = scmp.eq.s32.totalorder %s21, 1
      %p81 = por %p79, %p80
      %p82 = scmp.ne.s32.totalorder %s73, %s74
      %p83 = scmp.eq.s32.totalorder %s21, 0
      %p84 = por %p82, %p83
      %p85 = scmp.ne.s32.totalorder %s73, %s74
      %p86 = scmp.eq.s32.totalorder %s22, 1
      %p87 = por %p85, %p86
      %p89 = scmp.ne.s32.totalorder %s74, %s88
      %p90 = scmp.eq.s32.totalorder %s22, 0
      %p91 = por %p89, %p90
      %s92 = ssub.s32 %s16, %s23
      %p93 = scmp.eq.s32.totalorder %s92, 0
      %s95 = sadd.s32 %s94, 1
      %s96 = scalar_select %p93, %s94, %s95
      %p99 = pneg %p93
      %p100 = scmp.eq.s32.totalorder %s16, 1
      %p101 = por %p99, %p100
      %p102 = scmp.ne.s32.totalorder %s94, %s97
      %p103 = scmp.eq.s32.totalorder %s16, 0
      %p104 = por %p102, %p103
      %p105 = scmp.ne.s32.totalorder %s94, %s97
      %p106 = scmp.eq.s32.totalorder %s21, 1
      %p107 = por %p105, %p106
      %p108 = scmp.ne.s32.totalorder %s97, %s98
      %p109 = scmp.eq.s32.totalorder %s21, 0
      %p110 = por %p108, %p109
      %p111 = scmp.ne.s32.totalorder %s97, %s98
      %p112 = scmp.eq.s32.totalorder %s22, 1
      %p113 = por %p111, %p112
      %p115 = scmp.ne.s32.totalorder %s98, %s114
      %p116 = scmp.eq.s32.totalorder %s22, 0
      %p117 = por %p115, %p116
      %p118 = scmp.le.s32.totalorder 1, %s16
      %p119 = scmp.lt.s32.totalorder %s16, 3
      %p120 = pnand %p118, %p119
      %p121 = pneg %p120
      // Predicated region
      $region9: #{tpu_custom_call.1} parent=5 // pred_check
        _
      $region10: #{tpu_custom_call.1} parent=5 // pred_check_branch
        %123 = sbr.rel (%p120) target = $region12
      $region11: #{tpu_custom_call.1} parent=5 // pred_region
        %s124 = ssub.s32 %s16, 1
        // Predicated region
        $region13: #{tpu_custom_call.1} parent=11 // pred_check
          %p125 = pneg %p63
        $region14: #{tpu_custom_call.1} parent=11 // pred_check_branch
          %127 = sbr.rel (%p125) target = $region16
        $region15: #{tpu_custom_call.1} parent=11 // pred_region
          %s129 = ssub.s32 512, 512
          %130 = vsyncadd [#allocation6], %s129
          %s131 = sshll.u32 [#allocation5], 4
          %s132 = int_to_ptr.vmem [resolvable:$true] %s131
          %137 = dma.hbm_to_vmem [thread:$0]  %s1, 512, %s132, [#allocation6], 128, 128, 8
        $region16: #{tpu_custom_call.1} parent=11 // pred_fallthru
          _
        // Predicated region
        $region17: #{tpu_custom_call.1} parent=11 // pred_check
          %p138 = pneg %p84
        $region18: #{tpu_custom_call.1} parent=11 // pred_check_branch
          %140 = sbr.rel (%p138) target = $region20
        $region19: #{tpu_custom_call.1} parent=11 // pred_region
          %s142 = ssub.s32 512, 512
          %143 = vsyncadd [#allocation6], %s142
          %s144 = sshll.u32 [#allocation7], 4
          %s145 = int_to_ptr.vmem [resolvable:$true] %s144
          %150 = dma.hbm_to_vmem [thread:$0]  %s2, 512, %s145, [#allocation6], 128, 128, 8
        $region20: #{tpu_custom_call.1} parent=11 // pred_fallthru
          _
      $region12: #{tpu_custom_call.1} parent=5 // pred_fallthru
        _
      %p151 = scmp.lt.s32.totalorder %s16, 2
      // Predicated region
      $region21: #{tpu_custom_call.1} parent=5 // pred_check
        %p152 = pneg %p151
      $region22: #{tpu_custom_call.1} parent=5 // pred_check_branch
        %154 = sbr.rel (%p152) target = $region24
      $region23: #{tpu_custom_call.1} parent=5 // pred_region
        // Predicated region
        $region25: #{tpu_custom_call.1} parent=23 // pred_check
          %p155 = pneg %p36
        $region26: #{tpu_custom_call.1} parent=23 // pred_check_branch
          %157 = sbr.rel (%p155) target = $region28
        $region27: #{tpu_custom_call.1} parent=23 // pred_region
          %s158 = sand.u32 %s26, 1
          %s159 = scalar_lea.sflag [#allocation3], %s158
          %s160 = sand.u32 %s26, 1
          %s161 = smul.addr %s160, 24
          %s162 = scalar_lea.vmem [#allocation2], %s161
          %s164 = ssub.s32 384, 384
          %165 = vsyncadd %s159, %s164
          %s166 = smul.addr %s16, 6
          %s167 = smul.addr %s166, 64
          %s168 = scalar_lea.hbm %s0, %s167
          %s169 = sshll.u32 %s162, 4
          %s170 = int_to_ptr.vmem [resolvable:$true] %s169
          %175 = dma.hbm_to_vmem [thread:$0]  %s168, 384, %s170, %s159, 192, 192, 12
        $region28: #{tpu_custom_call.1} parent=23 // pred_fallthru
          _
      $region24: #{tpu_custom_call.1} parent=5 // pred_fallthru
        _
      %p176 = scmp.le.s32.totalorder 1, %s16
      %p177 = scmp.lt.s32.totalorder %s16, 3
      %p178 = pnand %p176, %p177
      %p179 = pneg %p178
      // Predicated region
      $region29: #{tpu_custom_call.1} parent=5 // pred_check
        _
      $region30: #{tpu_custom_call.1} parent=5 // pred_check_branch
        %181 = sbr.rel (%p178) target = $region32
      $region31: #{tpu_custom_call.1} parent=5 // pred_region
        %s182 = ssub.s32 %s16, 1
        %s183 = sand.u32 %s29, 1
        %s184 = scalar_lea.sflag [#allocation3], %s183
        %s185 = sand.u32 %s29, 1
        %s186 = smul.addr %s185, 24
        %s187 = scalar_lea.vmem [#allocation2], %s186
        // Predicated region
        $region33: #{tpu_custom_call.1} parent=31 // pred_check
          %p188 = pneg %p42
        $region34: #{tpu_custom_call.1} parent=31 // pred_check_branch
          %190 = sbr.rel (%p188) target = $region36
        $region35: #{tpu_custom_call.1} parent=31 // pred_region
          %191 = dma.done %s184, 384
        $region36: #{tpu_custom_call.1} parent=31 // pred_fallthru
          _
        // Predicated region
        $region37: #{tpu_custom_call.1} parent=31 // pred_check
          %p192 = pneg %p63
        $region38: #{tpu_custom_call.1} parent=31 // pred_check_branch
          %194 = sbr.rel (%p192) target = $region40
        $region39: #{tpu_custom_call.1} parent=31 // pred_region
          %195 = dma.done [#allocation6], 512
        $region40: #{tpu_custom_call.1} parent=31 // pred_fallthru
          _
        // Predicated region
        $region41: #{tpu_custom_call.1} parent=31 // pred_check
          %p196 = pneg %p84
        $region42: #{tpu_custom_call.1} parent=31 // pred_check_branch
          %198 = sbr.rel (%p196) target = $region44
        $region43: #{tpu_custom_call.1} parent=31 // pred_region
          %199 = dma.done [#allocation6], 512
        $region44: #{tpu_custom_call.1} parent=31 // pred_fallthru
          _
        %s200 = sand.u32 %s29, 1
        %s201 = scalar_lea.sflag [#allocation3], %s200
        %s202 = sand.u32 %s29, 1
        %s203 = smul.addr %s202, 24
        %s204 = scalar_lea.vmem [#allocation2], %s203
        %p205 = pneg %p42
        %p206 = pneg %p39
        %p207 = pneg %p63
        %p208 = pneg %p60
        %p209 = pneg %p84
        %p210 = pneg %p81
        %p211 = pneg %p110
        %p212 = pneg %p107
        %s213 = sand.u32 %s97, 1
        %s214 = scalar_lea.sflag [#allocation4], %s213
        %s215 = sand.u32 %s97, 1
        %s216 = smul.addr %s215, 96
        %s217 = scalar_lea.vmem [#allocation8], %s216
        %v219 = vld [vmem:[%s187] sm:$0xff]
        %v220 = vld [vmem:[%s187 + $0x8] sm:$0xf]
        %v221 = vld [vmem:[%s187 + $0xc] sm:$0xff]
        %v222 = vld [vmem:[%s187 + $0x14] sm:$0xf]
        %v227 = vunpack.c.l.b16 %v219
        %v228 = vunpack.c.h.b16 %v219
        %v229 = vunpack.c.l.b16 %v220
        %v230 = vunpack.c.l.b16 %v221
        %v231 = vunpack.c.h.b16 %v221
        %v232 = vunpack.c.l.b16 %v222
        %v233 = vpack.c.b16 %v230, %v227
        %v234 = vpack.c.b16 %v231, %v228
        %v235 = vpack.c.b16 %v232, %v229
        %239 = vrot.lane.b32.xlu0 %v233, 127
        %v240 = vpop.permute.xlu0 %239
        %241 = vrot.lane.b32.xlu0 %v234, 127
        %v242 = vpop.permute.xlu0 %241
        %243 = vrot.lane.b32.xlu0 %v235, 127
        %v244 = vpop.permute.xlu0 %243
        %vm245 = vcmask 1039360
        %v246 = vsel %vm245, %v240, %v242
        %v247 = vsel %vm245, %v242, %v244
        %251 = vrot.lane.b32.xlu0 %v233, 126
        %v252 = vpop.permute.xlu0 %251
        %253 = vrot.lane.b32.xlu0 %v234, 126
        %v254 = vpop.permute.xlu0 %253
        %255 = vrot.lane.b32.xlu0 %v235, 126
        %v256 = vpop.permute.xlu0 %255
        %vm257 = vcmask 1031168
        %v258 = vsel %vm257, %v252, %v254
        %v259 = vsel %vm257, %v254, %v256
        %263 = vrot.lane.b32.xlu0 %v233, 110
        %v264 = vpop.permute.xlu0 %263
        %265 = vrot.lane.b32.xlu0 %v234, 110
        %v266 = vpop.permute.xlu0 %265
        %267 = vrot.lane.b32.xlu0 %v235, 110
        %v268 = vpop.permute.xlu0 %267
        %vm269 = vcmask 900096
        %v270 = vsel %vm269, %v264, %v266
        %v271 = vsel %vm269, %v266, %v268
        %275 = vrot.lane.b32.xlu0 %v233, 109
        %v276 = vpop.permute.xlu0 %275
        %277 = vrot.lane.b32.xlu0 %v234, 109
        %v278 = vpop.permute.xlu0 %277
        %279 = vrot.lane.b32.xlu0 %v235, 109
        %v280 = vpop.permute.xlu0 %279
        %vm281 = vcmask 891904
        %v282 = vsel %vm281, %v276, %v278
        %v283 = vsel %vm281, %v278, %v280
        %287 = vrot.lane.b32.xlu0 %v233, 108
        %v288 = vpop.permute.xlu0 %287
        %289 = vrot.lane.b32.xlu0 %v234, 108
        %v290 = vpop.permute.xlu0 %289
        %291 = vrot.lane.b32.xlu0 %v235, 108
        %v292 = vpop.permute.xlu0 %291
        %vm293 = vcmask 883712
        %v294 = vsel %vm293, %v288, %v290
        %v295 = vsel %vm293, %v290, %v292
        %299 = vrot.lane.b32.xlu0 %v233, 92
        %v300 = vpop.permute.xlu0 %299
        %301 = vrot.lane.b32.xlu0 %v234, 92
        %v302 = vpop.permute.xlu0 %301
        %303 = vrot.lane.b32.xlu0 %v235, 92
        %v304 = vpop.permute.xlu0 %303
        %vm305 = vcmask 752640
        %v306 = vsel %vm305, %v300, %v302
        %v307 = vsel %vm305, %v302, %v304
        %311 = vrot.lane.b32.xlu0 %v233, 91
        %v312 = vpop.permute.xlu0 %311
        %313 = vrot.lane.b32.xlu0 %v234, 91
        %v314 = vpop.permute.xlu0 %313
        %315 = vrot.lane.b32.xlu0 %v235, 91
        %v316 = vpop.permute.xlu0 %315
        %vm317 = vcmask 744448
        %v318 = vsel %vm317, %v312, %v314
        %v319 = vsel %vm317, %v314, %v316
        %323 = vrot.lane.b32.xlu0 %v233, 90
        %v324 = vpop.permute.xlu0 %323
        %325 = vrot.lane.b32.xlu0 %v234, 90
        %v326 = vpop.permute.xlu0 %325
        %327 = vrot.lane.b32.xlu0 %v235, 90
        %v328 = vpop.permute.xlu0 %327
        %vm329 = vcmask 736256
        %v330 = vsel %vm329, %v324, %v326
        %v331 = vsel %vm329, %v326, %v328
        %v335 = vld [vmem:[#allocation5] sm:$0xff]
        %v336 = vld [vmem:[#allocation5 + $0x8] sm:$0xff]
        %v337 = vld [vmem:[#allocation5 + $0x10] sm:$0xff]
        %v338 = vld [vmem:[#allocation5 + $0x18] sm:$0xff]
        %v339 = vld [vmem:[#allocation7] sm:$0xff]
        %v340 = vld [vmem:[#allocation7 + $0x8] sm:$0xff]
        %v341 = vld [vmem:[#allocation7 + $0x10] sm:$0xff]
        %v342 = vld [vmem:[#allocation7 + $0x18] sm:$0xff]
        %344 = vset.pattern.permute.xlu0 0
        %345 = vperm.xlu0 %344, %v339
        %v346 = vpop.permute.xlu0 %345
        %349 = vset.pattern.permute.xlu0 0
        %350 = vperm.xlu0 %349, %v340
        %v351 = vpop.permute.xlu0 %350
        %354 = vset.pattern.permute.xlu0 0
        %355 = vperm.xlu0 %354, %v341
        %v356 = vpop.permute.xlu0 %355
        %359 = vset.pattern.permute.xlu0 0
        %360 = vperm.xlu0 %359, %v342
        %v361 = vpop.permute.xlu0 %360
        %v367 = vunpack.c.l.b16 %v335
        %v368 = vunpack.c.h.b16 %v335
        %v369 = vunpack.c.l.b16 %v336
        %v370 = vunpack.c.h.b16 %v336
        %v371 = vunpack.c.l.b16 %v337
        %v372 = vunpack.c.h.b16 %v337
        %v373 = vunpack.c.l.b16 %v338
        %v374 = vunpack.c.h.b16 %v338
        %v375 = vpack.c.b16 %v369, %v367
        %v376 = vpack.c.b16 %v370, %v368
        %v377 = vpack.c.b16 %v373, %v371
        %v378 = vpack.c.b16 %v374, %v372
        %vm381 = vcmask 130048
        %v383 = vsel %vm381, %v376, 0
        %v386 = vsel %vm381, %v378, 0
        %388 = vmatprep.subr.bf16.mxu0 %v234
        %389 = vmatpush1.bf16.msra.mxu0 %v233
        %390 = vmatprep.subr.bf16.mxu0 %v247
        %391 = vmatpush1.bf16.msra.mxu0 %v246
        %392 = vmatprep.subr.bf16.mxu0 %v259
        %393 = vmatpush1.bf16.msra.mxu0 %v258
        %394 = vmatprep.subr.bf16.mxu0 %v271
        %395 = vmatpush1.bf16.msra.mxu0 %v270
        %396 = vmatprep.subr.bf16.mxu0 %v283
        %397 = vmatpush1.bf16.msra.mxu0 %v282
        %398 = vmatprep.subr.bf16.mxu0 %v295
        %399 = vmatpush1.bf16.msra.mxu0 %v294
        %400 = vmatprep.subr.bf16.mxu0 %v307
        %401 = vmatpush1.bf16.msra.mxu0 %v306
        %402 = vmatprep.subr.bf16.mxu0 %v319
        %403 = vmatpush1.bf16.msra.mxu0 %v318
        %404 = vmatprep.subr.bf16.mxu0 %v331
        %405 = vmatpush1.bf16.msra.mxu0 %v330
        %406 = vmatprep.subr.bf16.mxu0 0
        %407 = vmatpush1.bf16.msra.mxu0 0
        %408 = vmatprep.subr.bf16.mxu0 0
        %409 = vmatpush1.bf16.msra.mxu0 0
        %410 = vmatprep.subr.bf16.mxu0 0
        %411 = vmatpush1.bf16.msra.mxu0 0
        %412 = vmatprep.subr.bf16.mxu0 0
        %413 = vmatpush1.bf16.msra.mxu0 0
        %414 = vmatprep.subr.bf16.mxu0 0
        %415 = vmatpush1.bf16.msra.mxu0 0
        %416 = vmatprep.subr.bf16.mxu0 0
        %417 = vmatpush1.bf16.msra.mxu0 0
        %418 = vmatprep.subr.bf16.mxu0 0
        %419 = vmatpush1.bf16.msra.mxu0 0
        %420 = vmatprep.mubr.bf16.mxu0 %v383
        %421 = vmatmul.mubr.bf16.gmra.mrb[0].mxu0 %v375
        %v422 = vpop.f32.mrb[0].mxu0
        %v423 = vadd.f32 %v346, %v422
        %v424 = vpop.f32.mrb[0].mxu0
        %v425 = vadd.f32 %v346, %v424
        %v426 = vpop.f32.mrb[0].mxu0
        %v427 = vadd.f32 %v351, %v426
        %v428 = vpop.f32.mrb[0].mxu0
        %v429 = vadd.f32 %v351, %v428
        %430 = vmatprep.mubr.bf16.mxu0 %v386
        %431 = vmatmul.mubr.bf16.gmra.mrb[0].mxu0 %v377
        %v432 = vpop.f32.mrb[0].mxu0
        %v433 = vadd.f32 %v356, %v432
        %v434 = vpop.f32.mrb[0].mxu0
        %v435 = vadd.f32 %v356, %v434
        %v436 = vpop.f32.mrb[0].mxu0
        %v437 = vadd.f32 %v361, %v436
        %v438 = vpop.f32.mrb[0].mxu0
        %v439 = vadd.f32 %v361, %v438
        %440 = vdwg.mxu0
        %441 = vmatprep.subr.bf16.mxu0 0
        %442 = vmatpush1.bf16.msra.mxu0 %v235
        %443 = vmatprep.subr.bf16.mxu0 0
        %444 = vmatpush1.bf16.msra.mxu0 %v244
        %445 = vmatprep.subr.bf16.mxu0 0
        %446 = vmatpush1.bf16.msra.mxu0 %v256
        %447 = vmatprep.subr.bf16.mxu0 0
        %448 = vmatpush1.bf16.msra.mxu0 %v268
        %449 = vmatprep.subr.bf16.mxu0 0
        %450 = vmatpush1.bf16.msra.mxu0 %v280
        %451 = vmatprep.subr.bf16.mxu0 0
        %452 = vmatpush1.bf16.msra.mxu0 %v292
        %453 = vmatprep.subr.bf16.mxu0 0
        %454 = vmatpush1.bf16.msra.mxu0 %v304
        %455 = vmatprep.subr.bf16.mxu0 0
        %456 = vmatpush1.bf16.msra.mxu0 %v316
        %457 = vmatprep.subr.bf16.mxu0 0
        %458 = vmatpush1.bf16.msra.mxu0 %v328
        %459 = vmatprep.subr.bf16.mxu0 0
        %460 = vmatpush1.bf16.msra.mxu0 0
        %461 = vmatprep.subr.bf16.mxu0 0
        %462 = vmatpush1.bf16.msra.mxu0 0
        %463 = vmatprep.subr.bf16.mxu0 0
        %464 = vmatpush1.bf16.msra.mxu0 0
        %465 = vmatprep.subr.bf16.mxu0 0
        %466 = vmatpush1.bf16.msra.mxu0 0
        %467 = vmatprep.subr.bf16.mxu0 0
        %468 = vmatpush1.bf16.msra.mxu0 0
        %469 = vmatprep.subr.bf16.mxu0 0
        %470 = vmatpush1.bf16.msra.mxu0 0
        %471 = vmatprep.subr.bf16.mxu0 0
        %472 = vmatpush1.bf16.msra.mxu0 0
        %473 = vmatprep.mubr.bf16.mxu0 %v383
        %474 = vmatmul.mubr.bf16.gmra.mrb[0].mxu0 %v375
        %v475 = vpop.f32.mrb[0].mxu0
        %v476 = vadd.f32 %v346, %v475
        %v477 = vpop.f32.mrb[0].mxu0
        %v478 = vpop.f32.mrb[0].mxu0
        %v479 = vadd.f32 %v351, %v478
        %v480 = vpop.f32.mrb[0].mxu0
        %481 = vmatprep.mubr.bf16.mxu0 %v386
        %482 = vmatmul.mubr.bf16.gmra.mrb[0].mxu0 %v377
        %v483 = vpop.f32.mrb[0].mxu0
        %v484 = vadd.f32 %v356, %v483
        %v485 = vpop.f32.mrb[0].mxu0
        %v486 = vpop.f32.mrb[0].mxu0
        %v487 = vadd.f32 %v361, %v486
        %v488 = vpop.f32.mrb[0].mxu0
        %489 = vdwg.mxu0
        %490 = vst [vmem:[%s217] sm:$0xff] %v423
        %491 = vst [vmem:[%s217 + $0x8] sm:$0xff] %v425
        %vm492 = vcmask 261120
        %493 = vst.msk [vmem:[%s217 + $0x10] sm:$0xff] %vm492, %v476
        %494 = vst [vmem:[%s217 + $0x18] sm:$0xff] %v427
        %495 = vst [vmem:[%s217 + $0x20] sm:$0xff] %v429
        %496 = vst.msk [vmem:[%s217 + $0x28] sm:$0xff] %vm492, %v479
        %497 = vst [vmem:[%s217 + $0x30] sm:$0xff] %v433
        %498 = vst [vmem:[%s217 + $0x38] sm:$0xff] %v435
        %499 = vst.msk [vmem:[%s217 + $0x40] sm:$0xff] %vm492, %v484
        %500 = vst [vmem:[%s217 + $0x48] sm:$0xff] %v437
        %501 = vst [vmem:[%s217 + $0x50] sm:$0xff] %v439
        %502 = vst.msk [vmem:[%s217 + $0x58] sm:$0xff] %vm492, %v487
        %s503 = sand.u32 %s97, 1
        %s504 = scalar_lea.sflag [#allocation4], %s503
        %s505 = sand.u32 %s97, 1
        %s506 = smul.addr %s505, 96
        %s507 = scalar_lea.vmem [#allocation8], %s506
        // Predicated region
        $region45: #{tpu_custom_call.1} parent=31 // pred_check
          %p508 = pneg %p107
        $region46: #{tpu_custom_call.1} parent=31 // pred_check_branch
          %510 = sbr.rel (%p508) target = $region48
        $region47: #{tpu_custom_call.1} parent=31 // pred_region
          %s512 = ssub.s32 1536, 1536
          %513 = vsyncadd %s504, %s512
          %s514 = smul.addr %s21, 12
          %s515 = smul.addr %s514, 128
          %s516 = scalar_lea.hbm %s3, %s515
          %s517 = sshll.u32 %s507, 4
          %s518 = int_to_ptr.vmem [resolvable:$true] %s517
          %523 = dma.vmem_to_hbm [thread:$0]  %s518, 1536, %s516, %s504, 384, 384, 24
        $region48: #{tpu_custom_call.1} parent=31 // pred_fallthru
          _
      $region32: #{tpu_custom_call.1} parent=5 // pred_fallthru
        _
      %p524 = scmp.le.s32.totalorder 2, %s16
      // Predicated region
      $region49: #{tpu_custom_call.1} parent=5 // pred_check
        %p525 = pneg %p524
      $region50: #{tpu_custom_call.1} parent=5 // pred_check_branch
        %527 = sbr.rel (%p525) target = $region52
      $region51: #{tpu_custom_call.1} parent=5 // pred_region
        %s528 = ssub.s32 %s16, 2
        // Predicated region
        $region53: #{tpu_custom_call.1} parent=51 // pred_check
          %p529 = pneg %p113
        $region54: #{tpu_custom_call.1} parent=51 // pred_check_branch
          %531 = sbr.rel (%p529) target = $region56
        $region55: #{tpu_custom_call.1} parent=51 // pred_region
          %s532 = sand.u32 %s98, 1
          %s533 = scalar_lea.sflag [#allocation4], %s532
          %s534 = sand.u32 %s98, 1
          %s535 = smul.addr %s534, 96
          %s536 = scalar_lea.vmem [#allocation8], %s535
          %537 = dma.done %s533, 1536
        $region56: #{tpu_custom_call.1} parent=51 // pred_fallthru
          _
      $region52: #{tpu_custom_call.1} parent=5 // pred_fallthru
        _
    $region6: #{tpu_custom_call.1} parent=1 // loop_footer
      %s20 = sadd.s32 1, %s16
    $region7: #{tpu_custom_call.1} parent=1 // loop_footer_branch
      %15 = sbr.rel target = $region3
    $region8: #{tpu_custom_call.1} parent=1 // loop_exit
      _
    %538 = vsyncpa [#allocation3], 1
    %s539 = scalar_lea.sflag [#allocation3], 1
    %540 = vsyncpa %s539, 1
    %541 = vsyncpa [#allocation6], 1
    %542 = vsyncpa [#allocation4], 1
    %s543 = scalar_lea.sflag [#allocation4], 1
    %544 = vsyncpa %s543, 1

</llo_original>
